<compile_context>
chip_gen: v5e
topology: v5e:2x2
jax: 0.10.0
libtpu: 0.0.40
codegen_flags: <defaults>
</compile_context>

<pallas_src>
import functools
import math

import jax
import jax.numpy as jnp
from jax.experimental import pallas as pl
from jax.experimental.pallas import tpu as pltpu


def _pair(v):
    return (v, v) if isinstance(v, int) else tuple(v)


def _round_up(a, b):
    return (a + b - 1) // b * b


def _cdiv(a, b):
    return (a + b - 1) // b


# ---------------------------------------------------------------------------
# Plain-JAX glue: deformable im2col (bilinear corner gathers + weighted combine).
# Matches the semantics of the CUDA deformable_im2col kernel:
#   - a sample is zero if (h_im, w_im) is outside (-1, H) x (-1, W)
#   - each of the 4 corners contributes only if it lies inside [0, H-1] x [0, W-1]
# Returns cols: (N, C_in*kh*kw, Ho*Wo), row index c_im*(kh*kw)+k so it matches
# weight.reshape(C_out, C_in*kh*kw).  The final 4-corner sum is cast to `out_dtype`
# (bf16 for the kernel path) so the slab is written to HBM once, already narrow.
# ---------------------------------------------------------------------------
def _deform_cols(x, offset, kernel_size, stride, padding, dilation, deform_groups,
                 out_dtype=jnp.bfloat16):
    N, C, H, W = x.shape
    kh, kw = kernel_size
    sh, sw = stride
    ph, pw = padding
    dh, dw = dilation
    Ho = (H + 2 * ph - (dh * (kh - 1) + 1)) // sh + 1
    Wo = (W + 2 * pw - (dw * (kw - 1) + 1)) // sw + 1
    P = Ho * Wo
    KK = kh * kw
    cpg = C // deform_groups

    # offset channels within a group are ordered [dh_0, dw_0, dh_1, dw_1, ...]
    off = offset.reshape(N, deform_groups, KK, 2, Ho, Wo).astype(jnp.float32)
    off_h = off[:, :, :, 0]  # (N, dg, KK, Ho, Wo)
    off_w = off[:, :, :, 1]

    k_i = jnp.arange(KK) // kw
    k_j = jnp.arange(KK) % kw
    h_base = (jnp.arange(Ho)[None, :] * sh - ph + k_i[:, None] * dh).astype(jnp.float32)
    w_base = (jnp.arange(Wo)[None, :] * sw - pw + k_j[:, None] * dw).astype(jnp.float32)

    h_im = h_base[None, None, :, :, None] + off_h  # (N, dg, KK, Ho, Wo)
    w_im = w_base[None, None, :, None, :] + off_w  # (N, dg, KK, Ho, Wo)

    valid = (h_im > -1.0) & (w_im > -1.0) & (h_im < H) & (w_im < W)

    h_low = jnp.floor(h_im)
    w_low = jnp.floor(w_im)
    lh = h_im - h_low
    lw = w_im - w_low
    hh = 1.0 - lh
    hw = 1.0 - lw
    h_low_i = h_low.astype(jnp.int32)
    w_low_i = w_low.astype(jnp.int32)
    h_high_i = h_low_i + 1
    w_high_i = w_low_i + 1

    x_flat = x.reshape(N, deform_groups, cpg, H * W).astype(jnp.float32)

    def corner(hi, wi, bw):
        ok = (hi >= 0) & (hi <= H - 1) & (wi >= 0) & (wi <= W - 1) & valid
        hic = jnp.clip(hi, 0, H - 1)
        wic = jnp.clip(wi, 0, W - 1)
        # Index shared across the per-group channel axis: shape (N, dg, 1, KK*P).
        # take_along_axis turns the size-1 channel dim into a full-cpg gather slice,
        # so no cpg-broadcast int32 index tensor is ever materialized.
        flat = (hic * W + wic).reshape(N, deform_groups, 1, KK * P)
        v = jnp.take_along_axis(x_flat, flat, axis=3, mode="clip")  # (N, dg, cpg, KK*P)
        # bilinear weight depends only on (dg, KK, P); broadcast lazily over channels.
        wgt = jnp.where(ok, bw, 0.0).reshape(N, deform_groups, 1, KK * P)
        return v * wgt

    cols = corner(h_low_i, w_low_i, hh * hw)
    cols = cols + corner(h_low_i, w_high_i, hh * lw)
    cols = cols + corner(h_high_i, w_low_i, lh * hw)
    cols = cols + corner(h_high_i, w_high_i, lh * lw)
    # Cast before the slab leaves the gather/combine fusion -> written once, narrow.
    cols = cols.astype(out_dtype)
    # (dg, cpg, KK, P) flattens to row index c_im*(kh*kw)+k, matching the weight layout.
    return cols.reshape(N, C * KK, P), (Ho, Wo)


# ---------------------------------------------------------------------------
# Pallas kernel: (C_out, CK) x (CK, TP) bf16 matmul on the MXU, f32 accumulation.
# Refs are 2-D (batch dim squeezed); output tile is lane-dense (TP multiple of 128);
# the last P-tile may be partial (masked stores).
# ---------------------------------------------------------------------------
def _deform_matmul_kernel(w_ref, col_ref, o_ref):
    o_ref[...] = jnp.dot(w_ref[...], col_ref[...],
                         preferred_element_type=jnp.float32)


def conv_offset2d_pallas(x, offset, weight, stride=1, padding=0, dilation=1,
                         num_deformable_groups=1, tile_p=1024):
    stride = _pair(stride)
    padding = _pair(padding)
    dilation = _pair(dilation)
    N, C_in, H, W = x.shape
    C_out, _, kh, kw = weight.shape

    cols, (Ho, Wo) = _deform_cols(
        x, offset, (kh, kw), stride, padding, dilation, num_deformable_groups,
        out_dtype=jnp.bfloat16)
    P = Ho * Wo
    CK = C_in * kh * kw

    # Lane-dense tile over the flattened output-pixel axis, sized from a VMEM budget:
    # double-buffered bf16 cols tiles cost 2 * CK * TP * 2 B; ~12 MiB keeps us well
    # inside v7x's 64 MiB physical / 32 MiB scoped VMEM while letting TP reach 1024+
    # for TDAN-scale CK (<= ~3K).  v5e/v6e have even more headroom.
    cols_budget_bytes = 12 << 20
    tp_budget = max(128, (cols_budget_bytes // (4 * CK)) // 128 * 128)
    TP = min(tile_p, tp_budget, _round_up(P, 128))
    # Keep >= 2 P-tiles for single-image inference so both v7x TensorCores get work.
    if N == 1 and P > 128:
        TP = min(TP, _round_up(_cdiv(P, 2), 128))
    num_p = _cdiv(P, TP)

    # Weight stays bf16 (tiny; quantization error is dominated by the bf16 cols slab).
    w_mat = weight.reshape(C_out, CK).astype(jnp.bfloat16)

    cost = pl.CostEstimate(
        flops=2 * N * C_out * CK * P,
        transcendentals=0,
        bytes_accessed=N * CK * P * 2 + C_out * CK * 2 + N * C_out * P * 4)

    out_flat = pl.pallas_call(
        _deform_matmul_kernel,
        out_shape=jax.ShapeDtypeStruct((N, C_out, P), jnp.float32),
        grid=(N, num_p),
        in_specs=[
            # weight matrix: constant block index across the grid -> resident in VMEM
            pl.BlockSpec((C_out, CK), lambda n, p: (0, 0)),
            # im2col slab tile, batch dim squeezed; last tile may be partial (ragged P)
            pl.BlockSpec((None, CK, TP), lambda n, p: (n, 0, p)),
        ],
        out_specs=pl.BlockSpec((None, C_out, TP), lambda n, p: (n, 0, p)),
        compiler_params=pltpu.CompilerParams(
            dimension_semantics=("parallel", "parallel"),
            vmem_limit_bytes=32 * 1024 * 1024),
        cost_estimate=cost,
    )(w_mat, cols)

    # No pad/slice pass: out_flat already has the exact P extent.
    return out_flat.reshape(N, C_out, Ho, Wo)


if __name__ == "__main__":
    def run_case(key, N, C_in, C_out, H, W, k, stride, padding, dilation, dg):
        Ho = (H + 2 * padding - (dilation * (k - 1) + 1)) // stride + 1
        Wo = (W + 2 * padding - (dilation * (k - 1) + 1)) // stride + 1
        k1, k2, k3 = jax.random.split(key, 3)
        x = jax.random.normal(k1, (N, C_in, H, W), jnp.float32)
        offset = 2.0 * jax.random.normal(k2, (N, dg * 2 * k * k, Ho, Wo), jnp.float32)

        # reset_parameters(): uniform(-stdv, stdv) with stdv = 1/sqrt(C_in*kh*kw)
        n_fan = C_in * k * k
        stdv = 1.0 / math.sqrt(n_fan)
        weight = jax.random.uniform(k3, (C_out, C_in, k, k), jnp.float32, -stdv, stdv)

        fwd = jax.jit(functools.partial(
            conv_offset2d_pallas, stride=stride, padding=padding,
            dilation=dilation, num_deformable_groups=dg))
        out = jax.block_until_ready(fwd(x, offset, weight))
        assert out.shape == (N, C_out, Ho, Wo)

        # Reference 1 (tight): same bf16 quantization of cols / weight, f32 matmul in XLA.
        cols_bf, _ = _deform_cols(x, offset, (k, k), _pair(stride), _pair(padding),
                                  _pair(dilation), dg, out_dtype=jnp.bfloat16)
        w_bf = weight.reshape(C_out, -1).astype(jnp.bfloat16).astype(jnp.float32)
        ref_bf = jnp.einsum("ok,nkp->nop", w_bf,
                            cols_bf.astype(jnp.float32)).reshape(N, C_out, Ho, Wo)
        assert jnp.allclose(out, ref_bf, atol=2e-3, rtol=2e-3), \
            float(jnp.max(jnp.abs(out - ref_bf)))

        # Reference 2 (loose): full-f32 deformable conv (bf16 storage shifts numerics).
        cols_f32, _ = _deform_cols(x, offset, (k, k), _pair(stride), _pair(padding),
                                   _pair(dilation), dg, out_dtype=jnp.float32)
        ref_f32 = jnp.einsum("ok,nkp->nop", weight.reshape(C_out, -1),
                             cols_f32).reshape(N, C_out, Ho, Wo)
        assert jnp.allclose(out, ref_f32, atol=3e-2, rtol=3e-2), \
            float(jnp.max(jnp.abs(out - ref_f32)))

    key = jax.random.PRNGKey(0)
    ka, kb = jax.random.split(key)
    # Case 1: ConvOffset2d(4, 8, 3, padding=1), exact lane-dense tiles (P = 256).
    run_case(ka, N=2, C_in=4, C_out=8, H=16, W=16, k=3,
             stride=1, padding=1, dilation=1, dg=1)
    # Case 2: N=1 (two P-tiles for the two v7x TensorCores), ragged last tile
    # (P = 1089 -> TP = 576 -> 576 + 513 with masked store), deform_groups = 2.
    run_case(kb, N=1, C_in=4, C_out=8, H=33, W=33, k=3,
             stride=1, padding=1, dilation=1, dg=2)

    print("KERNEL_OK")
</pallas_src>

<mosaic_0001>
module attributes {stable_mosaic.version = 11 : i64} {
  func.func @_deform_matmul_kernel(%arg0: i32, %arg1: i32, %arg2: memref<8x36xbf16, #tpu.memory_space<vmem>>, %arg3: memref<1x36x256xbf16, #tpu.memory_space<vmem>>, %arg4: memref<1x8x256xf32, #tpu.memory_space<vmem>>) attributes {dimension_semantics = [#tpu.dimension_semantics<parallel>, #tpu.dimension_semantics<parallel>], iteration_bounds = array<i64: 2, 1>, scalar_prefetch = 0 : i64, scratch_operands = 0 : i64, tpu.core_type = #tpu.core_type<tc>, window_params = [{pipeline_mode = #tpu.pipeline_mode<synchronous>, transform_indices = @transform_0, window_bounds = array<i64: 8, 36>}, {transform_indices = @transform_1, window_bounds = array<i64: 1, 36, 256>}, {transform_indices = @transform_2, window_bounds = array<i64: 1, 8, 256>}]} {
    %c0 = arith.constant 0 : index
    %c0_0 = arith.constant 0 : index
    %0 = vector.load %arg2[%c0, %c0_0] : memref<8x36xbf16, #tpu.memory_space<vmem>>, vector<8x36xbf16>
    %c0_1 = arith.constant 0 : index
    %c0_2 = arith.constant 0 : index
    %c0_3 = arith.constant 0 : index
    %1 = vector.load %arg3[%c0_1, %c0_2, %c0_3] : memref<1x36x256xbf16, #tpu.memory_space<vmem>>, vector<1x36x256xbf16>
    %2 = vector.shape_cast %1 : vector<1x36x256xbf16> to vector<36x256xbf16>
    %cst = arith.constant dense<0.000000e+00> : vector<8x256xf32>
    %3 = tpu.matmul %0, %2, %cst {dimension_numbers = #tpu.dot_dimension_numbers<[1], [0], [0], [1], [0, 0, 1, 1], [], []>} : vector<8x36xbf16>, vector<36x256xbf16>, vector<8x256xf32> -> vector<8x256xf32>
    %c0_4 = arith.constant 0 : index
    %c0_5 = arith.constant 0 : index
    %c0_6 = arith.constant 0 : index
    %4 = vector.load %arg4[%c0_4, %c0_5, %c0_6] : memref<1x8x256xf32, #tpu.memory_space<vmem>>, vector<1x8x256xf32>
    %5 = vector.shape_cast %4 : vector<1x8x256xf32> to vector<8x256xf32>
    %6 = vector.shape_cast %3 : vector<8x256xf32> to vector<1x8x256xf32>
    tpu.vector_store %arg4[%c0_4, %c0_5, %c0_6], %6 {strides = array<i32>} : memref<1x8x256xf32, #tpu.memory_space<vmem>>, vector<1x8x256xf32>,
    return
  }
  func.func @transform_0(%arg0: i32, %arg1: i32) -> (i32, i32) {
    %c0_i32 = arith.constant 0 : i32
    %c0_i32_0 = arith.constant 0 : i32
    %c0_i32_1 = arith.constant 0 : i32
    return %c0_i32, %c0_i32_0 : i32, i32
  }
  func.func @transform_1(%arg0: i32, %arg1: i32) -> (i32, i32, i32) {
    %c0_i32 = arith.constant 0 : i32
    %c0_i32_0 = arith.constant 0 : i32
    return %arg0, %c0_i32, %arg1 : i32, i32, i32
  }
  func.func @transform_2(%arg0: i32, %arg1: i32) -> (i32, i32, i32) {
    %c0_i32 = arith.constant 0 : i32
    %c0_i32_0 = arith.constant 0 : i32
    return %arg0, %c0_i32, %arg1 : i32, i32, i32
  }
}

</mosaic_0001>

<llo_original>
// kernel: conv_offset2d_pallas.1
$region0: #{conv_offset2d_pallas.1}
  #allocation0 [shape = 'u32[]', space=smem, size = 0x4, offset = 0x4, fixed_abs, tag = 'smem constant byte address 0x4 - core index']
  #allocation1 [shape = 'u32[72,128]{1,0:T(1,128)}', space=vmem, size = 0x9000, scoped, tag = 'internal scratch']
  %s0 = inlined_call_operand.vmem [shape: bf16[8,36], index: 0, kind: input, shape index: {}]
  %s1 = inlined_call_operand.vmem [shape: bf16[2,36,256], index: 1, kind: input, shape index: {}]
  %s2 = inlined_call_operand.vmem [shape: f32[2,8,256], index: 2, kind: output, shape index: {}]
  %s3 = sld [smem:[#allocation0]]
  $region41: #{conv_offset2d_pallas.1} parent=0
    _
  %s5 = ssub.s32 1, %s3
  %s6 = scalar_select 0, %s5, %s3
  loop: start=0, step=1, limit=4
  $region2: #{conv_offset2d_pallas.1} parent=0 // loop_pre_header
    _
  $region3: #{conv_offset2d_pallas.1} parent=0 // loop_header
    %s8 = sphi 0, %s12
    %p9 = scmp.ge.s32.totalorder %s8, 4
    %s15 = sphi 0, %s27
    %s16 = sphi 0, %s23
    %s17 = sphi 0, %s15
    %s18 = sphi 0, %s16
    %s19 = sphi 0, %s17
    %s20 = sphi 0, %s18
    %s28 = sphi 0, %s28
    %s30 = sphi 0, %s28
    %s31 = sphi 0, %s30
    %s45 = sphi 0, %s31
    %s53 = sphi 0, %s55
    %s56 = sphi 0, %s53
    %s57 = sphi 0, %s56
    %s73 = sphi 0, %s57
    %s81 = sphi 0, %s83
    %s84 = sphi 0, %s81
    %s85 = sphi 0, %s84
    %s101 = sphi 0, %s85
  $region4: #{conv_offset2d_pallas.1} parent=0 // loop_header_branch
    %11 = sbr.rel (%p9) target = $region8
  $region5: #{conv_offset2d_pallas.1} parent=0 // loop_body
    %s13 = ssub.s32 %s8, 1
    %s14 = ssub.s32 %s8, 2
    %s21 = sadd.s32 1, %s16
    %p22 = scmp.ge.s32.totalorder %s21, 1
    %s23 = scalar_select %p22, 0, %s21
    %s24 = sadd.s32 1, %s15
    %s25 = scalar_select %p22, %s24, %s15
    %p26 = scmp.ge.s32.totalorder %s25, 2
    %s27 = scalar_select %p26, 0, %s25
    %s29 = sadd.s32 %s28, 1
    %p32 = scmp.eq.s32.totalorder %s8, 1
    %p33 = scmp.ne.s32.totalorder %s28, %s30
    %p34 = scmp.eq.s32.totalorder %s8, 0
    %p35 = por %p33, %p34
    %p36 = scmp.ne.s32.totalorder %s28, %s30
    %p37 = scmp.eq.s32.totalorder %s13, 1
    %p38 = por %p36, %p37
    %p39 = scmp.ne.s32.totalorder %s30, %s31
    %p40 = scmp.eq.s32.totalorder %s13, 0
    %p41 = por %p39, %p40
    %p42 = scmp.ne.s32.totalorder %s30, %s31
    %p43 = scmp.eq.s32.totalorder %s14, 1
    %p44 = por %p42, %p43
    %p46 = scmp.ne.s32.totalorder %s31, %s45
    %p47 = scmp.eq.s32.totalorder %s14, 0
    %p48 = por %p46, %p47
    %s49 = ssub.s32 %s15, %s27
    %s50 = ssub.s32 %s16, %s23
    %s51 = sor.u32 %s49, %s50
    %p52 = scmp.eq.s32.totalorder %s51, 0
    %s54 = sadd.s32 %s53, 1
    %s55 = scalar_select %p52, %s53, %s54
    %p58 = pneg %p52
    %p59 = scmp.eq.s32.totalorder %s8, 1
    %p60 = por %p58, %p59
    %p61 = scmp.ne.s32.totalorder %s53, %s56
    %p62 = scmp.eq.s32.totalorder %s8, 0
    %p63 = por %p61, %p62
    %p64 = scmp.ne.s32.totalorder %s53, %s56
    %p65 = scmp.eq.s32.totalorder %s13, 1
    %p66 = por %p64, %p65
    %p67 = scmp.ne.s32.totalorder %s56, %s57
    %p68 = scmp.eq.s32.totalorder %s13, 0
    %p69 = por %p67, %p68
    %p70 = scmp.ne.s32.totalorder %s56, %s57
    %p71 = scmp.eq.s32.totalorder %s14, 1
    %p72 = por %p70, %p71
    %p74 = scmp.ne.s32.totalorder %s57, %s73
    %p75 = scmp.eq.s32.totalorder %s14, 0
    %p76 = por %p74, %p75
    %s77 = ssub.s32 %s15, %s27
    %s78 = ssub.s32 %s16, %s23
    %s79 = sor.u32 %s77, %s78
    %p80 = scmp.eq.s32.totalorder %s79, 0
    %s82 = sadd.s32 %s81, 1
    %s83 = scalar_select %p80, %s81, %s82
    %p86 = pneg %p80
    %p87 = scmp.eq.s32.totalorder %s8, 1
    %p88 = por %p86, %p87
    %p89 = scmp.ne.s32.totalorder %s81, %s84
    %p90 = scmp.eq.s32.totalorder %s8, 0
    %p91 = por %p89, %p90
    %p92 = scmp.ne.s32.totalorder %s81, %s84
    %p93 = scmp.eq.s32.totalorder %s13, 1
    %p94 = por %p92, %p93
    %p95 = scmp.ne.s32.totalorder %s84, %s85
    %p96 = scmp.eq.s32.totalorder %s13, 0
    %p97 = por %p95, %p96
    %p98 = scmp.ne.s32.totalorder %s84, %s85
    %p99 = scmp.eq.s32.totalorder %s14, 1
    %p100 = por %p98, %p99
    %p102 = scmp.ne.s32.totalorder %s85, %s101
    %p103 = scmp.eq.s32.totalorder %s14, 0
    %p104 = por %p102, %p103
    %p105 = scmp.le.s32.totalorder 1, %s8
    %p106 = scmp.lt.s32.totalorder %s8, 3
    %p107 = pnand %p105, %p106
    %p108 = pneg %p107
    // Predicated region
    $region9: #{conv_offset2d_pallas.1} parent=5 // pred_check
      _
    $region10: #{conv_offset2d_pallas.1} parent=5 // pred_check_branch
      %110 = sbr.rel (%p107) target = $region12
    $region11: #{conv_offset2d_pallas.1} parent=5 // pred_region
      %s111 = ssub.s32 %s8, 1
      // Predicated region
      $region13: #{conv_offset2d_pallas.1} parent=11 // pred_check
        %p112 = pneg %p41
      $region14: #{conv_offset2d_pallas.1} parent=11 // pred_check_branch
        %114 = sbr.rel (%p112) target = $region16
      $region15: #{conv_offset2d_pallas.1} parent=11 // pred_region
        _
      $region16: #{conv_offset2d_pallas.1} parent=11 // pred_fallthru
        _
    $region12: #{conv_offset2d_pallas.1} parent=5 // pred_fallthru
      _
    %p115 = scmp.lt.s32.totalorder %s8, 2
    // Predicated region
    $region17: #{conv_offset2d_pallas.1} parent=5 // pred_check
      %p116 = pneg %p115
    $region18: #{conv_offset2d_pallas.1} parent=5 // pred_check_branch
      %118 = sbr.rel (%p116) target = $region20
    $region19: #{conv_offset2d_pallas.1} parent=5 // pred_region
      // Predicated region
      $region21: #{conv_offset2d_pallas.1} parent=19 // pred_check
        %p119 = pneg %p63
      $region22: #{conv_offset2d_pallas.1} parent=19 // pred_check_branch
        %121 = sbr.rel (%p119) target = $region24
      $region23: #{conv_offset2d_pallas.1} parent=19 // pred_region
        %s122 = smul.u32 2, %s16
        %p123 = scmp.lt.s32.totalorder %s15, 1
        %s124 = scalar_select %p123, %s15, 1
        %p125 = scmp.lt.s32.totalorder %s122, 1
        %s126 = scalar_select %p125, %s122, 1
        %s127 = smul.addr %s124, 10
        %s128 = sadd.s32 %s126, %s127
        %s129 = smul.addr %s128, 4
        %s130 = scalar_lea.vmem %s1, %s129
        %s131 = smul.u32 2, %s16
      $region24: #{conv_offset2d_pallas.1} parent=19 // pred_fallthru
        _
    $region20: #{conv_offset2d_pallas.1} parent=5 // pred_fallthru
      _
    %p132 = scmp.le.s32.totalorder 1, %s8
    %p133 = scmp.lt.s32.totalorder %s8, 3
    %p134 = pnand %p132, %p133
    %p135 = pneg %p134
    // Predicated region
    $region25: #{conv_offset2d_pallas.1} parent=5 // pred_check
      _
    $region26: #{conv_offset2d_pallas.1} parent=5 // pred_check_branch
      %137 = sbr.rel (%p134) target = $region28
    $region27: #{conv_offset2d_pallas.1} parent=5 // pred_region
      %s138 = ssub.s32 %s8, 1
      %p139 = pneg %p41
      %p140 = pneg %p38
      %s141 = smul.u32 2, %s18
      %p142 = scmp.lt.s32.totalorder %s17, 1
      %s143 = scalar_select %p142, %s17, 1
      %p144 = scmp.lt.s32.totalorder %s141, 1
      %s145 = scalar_select %p144, %s141, 1
      %s146 = smul.addr %s143, 10
      %s147 = sadd.s32 %s145, %s146
      %s148 = smul.addr %s147, 4
      %s149 = scalar_lea.vmem %s1, %s148
      %p150 = pneg %p69
      %p151 = pneg %p66
      %p152 = pneg %p97
      %p153 = pneg %p94
      %s154 = smul.u32 2, %s18
      %p155 = scmp.lt.s32.totalorder %s17, 1
      %s156 = scalar_select %p155, %s17, 1
      %p157 = scmp.lt.s32.totalorder %s154, 1
      %s158 = scalar_select %p157, %s154, 1
      %s159 = smul.addr %s156, 2
      %s160 = sadd.s32 %s158, %s159
      %s161 = smul.addr %s160, 8
      %s162 = scalar_lea.vmem %s2, %s161
      %s163 = smul.u32 2, %s18
      %p164 = scmp.lt.s32.totalorder %s17, 1
      %s165 = scalar_select %p164, %s17, 1
      %p166 = scmp.lt.s32.totalorder %s163, 1
      %s167 = scalar_select %p166, %s163, 1
      %s168 = smul.addr %s165, 10
      %s169 = sadd.s32 %s167, %s168
      %s170 = smul.addr %s169, 4
      %s171 = scalar_lea.vmem %s1, %s170
      %s172 = smul.u32 2, %s18
      %s173 = smul.u32 2, %s18
      %p174 = scmp.lt.s32.totalorder %s17, 1
      %s175 = scalar_select %p174, %s17, 1
      %p176 = scmp.lt.s32.totalorder %s173, 1
      %s177 = scalar_select %p176, %s173, 1
      %s178 = smul.addr %s175, 2
      %s179 = sadd.s32 %s177, %s178
      %s180 = smul.addr %s179, 8
      %s181 = scalar_lea.vmem %s2, %s180
      %s182 = smul.u32 2, %s18
      %v184 = vld [vmem:[%s0] sm:$0xf]
      %v185 = vld [vmem:[%s171] sm:$0xff]
      %v186 = vld [vmem:[%s171 + $0x8] sm:$0xff]
      %v187 = vld [vmem:[%s171 + $0x10] sm:$0xff]
      %v188 = vld [vmem:[%s171 + $0x18] sm:$0xff]
      %v189 = vld [vmem:[%s171 + $0x20] sm:$0x33]
      %v195 = vunpack.c.l.b16 %v185
      %v196 = vunpack.c.h.b16 %v185
      %v197 = vunpack.c.l.b16 %v186
      %v198 = vunpack.c.h.b16 %v186
      %v199 = vunpack.c.l.b16 %v187
      %v200 = vunpack.c.h.b16 %v187
      %v201 = vunpack.c.l.b16 %v188
      %v202 = vunpack.c.h.b16 %v188
      %v203 = vunpack.c.l.b16 %v189
      %v204 = vunpack.c.h.b16 %v189
      %v205 = vpack.c.b16 %v197, %v195
      %v206 = vpack.c.b16 %v198, %v196
      %v207 = vpack.c.b16 %v201, %v199
      %v208 = vpack.c.b16 %v202, %v200
      %v209 = vpack.c.b16 %v203, %v203
      %v210 = vpack.c.b16 %v204, %v204
      %vm215 = vcmask 293888
      %v217 = vsel %vm215, %v184, 0
      %vm219 = vcmask 1041408
      %v221 = vsel %vm219, %v209, 0
      %v224 = vsel %vm219, %v210, 0
      %226 = vmatpush.bf16.msra.mxu0 0
      %227 = vmatpush.bf16.msra.mxu0 0
      %228 = vmatpush.bf16.msra.mxu0 0
      %229 = vmatpush.bf16.msra.mxu0 0
      %230 = vmatpush.bf16.msra.mxu0 0
      %231 = vmatpush.bf16.msra.mxu0 %v221
      %232 = vmatpush.bf16.msra.mxu0 %v207
      %233 = vmatpush.bf16.msra.mxu0 %v205
      %234 = vmatmul.bf16.gmra.mxu0 %v217
      %v235 = vpop.f32.mrf.mxu0
      %v236 = vadd.f32 0.0, %v235
      %v237 = vpop.f32.mrf.mxu0
      %238 = vdwg.mxu0
      %239 = vmatpush.bf16.msra.mxu0 0
      %240 = vmatpush.bf16.msra.mxu0 0
      %241 = vmatpush.bf16.msra.mxu0 0
      %242 = vmatpush.bf16.msra.mxu0 0
      %243 = vmatpush.bf16.msra.mxu0 0
      %244 = vmatpush.bf16.msra.mxu0 %v224
      %245 = vmatpush.bf16.msra.mxu0 %v208
      %246 = vmatpush.bf16.msra.mxu0 %v206
      %247 = vmatmul.bf16.gmra.mxu0 %v217
      %v248 = vpop.f32.mrf.mxu0
      %v249 = vadd.f32 0.0, %v248
      %v250 = vpop.f32.mrf.mxu0
      %251 = vdwg.mxu0
      %252 = vst [vmem:[%s181] sm:$0xff] %v236
      %253 = vst [vmem:[%s181 + $0x8] sm:$0xff] %v249
      %s254 = smul.u32 2, %s18
      %p255 = scmp.lt.s32.totalorder %s17, 1
      %s256 = scalar_select %p255, %s17, 1
      %p257 = scmp.lt.s32.totalorder %s254, 1
      %s258 = scalar_select %p257, %s254, 1
      %s259 = smul.addr %s256, 2
      %s260 = sadd.s32 %s258, %s259
      %s261 = smul.addr %s260, 8
      %s262 = scalar_lea.vmem %s2, %s261
      // Predicated region
      $region29: #{conv_offset2d_pallas.1} parent=27 // pred_check
        %p263 = pneg %p94
      $region30: #{conv_offset2d_pallas.1} parent=27 // pred_check_branch
        %265 = sbr.rel (%p263) target = $region32
      $region31: #{conv_offset2d_pallas.1} parent=27 // pred_region
        %s266 = smul.u32 2, %s18
      $region32: #{conv_offset2d_pallas.1} parent=27 // pred_fallthru
        _
    $region28: #{conv_offset2d_pallas.1} parent=5 // pred_fallthru
      _
    %p267 = scmp.le.s32.totalorder 2, %s8
    // Predicated region
    $region33: #{conv_offset2d_pallas.1} parent=5 // pred_check
      %p268 = pneg %p267
    $region34: #{conv_offset2d_pallas.1} parent=5 // pred_check_branch
      %270 = sbr.rel (%p268) target = $region36
    $region35: #{conv_offset2d_pallas.1} parent=5 // pred_region
      %s271 = ssub.s32 %s8, 2
      // Predicated region
      $region37: #{conv_offset2d_pallas.1} parent=35 // pred_check
        %p272 = pneg %p100
      $region38: #{conv_offset2d_pallas.1} parent=35 // pred_check_branch
        %274 = sbr.rel (%p272) target = $region40
      $region39: #{conv_offset2d_pallas.1} parent=35 // pred_region
        %s275 = smul.u32 2, %s20
        %p276 = scmp.lt.s32.totalorder %s19, 1
        %s277 = scalar_select %p276, %s19, 1
        %p278 = scmp.lt.s32.totalorder %s275, 1
        %s279 = scalar_select %p278, %s275, 1
        %s280 = smul.addr %s277, 2
        %s281 = sadd.s32 %s279, %s280
        %s282 = smul.addr %s281, 8
        %s283 = scalar_lea.vmem %s2, %s282
      $region40: #{conv_offset2d_pallas.1} parent=35 // pred_fallthru
        _
    $region36: #{conv_offset2d_pallas.1} parent=5 // pred_fallthru
      _
  $region6: #{conv_offset2d_pallas.1} parent=0 // loop_footer
    %s12 = sadd.s32 1, %s8
  $region7: #{conv_offset2d_pallas.1} parent=0 // loop_footer_branch
    %7 = sbr.rel target = $region3
  $region8: #{conv_offset2d_pallas.1} parent=0 // loop_exit
    _

</llo_original>
